<compile_context>
chip_gen: v7x
topology: tpu7x:2x2x1
jax: 0.10.0
libtpu: 0.0.40
codegen_flags: <defaults>
</compile_context>

<pallas_src>
import functools

import jax
import jax.numpy as jnp
import numpy as np
from jax import lax
from jax.experimental import pallas as pl
from jax.experimental.pallas import tpu as pltpu


# ----------------------------- fused block kernel ----------------------------

def _temporal_block_kernel(*refs, kernel_size, dilation, length, b_tile,
                           has_downsample):
    """Fused TemporalBlock on one (C_in, b_tile*L) activation slab.

    refs = (x, w1f, b1, w2f, b2[, wdf, bd], out, x1_scratch, x2_scratch)
      x    : (C_in, b_tile*L)          activation slab (one L-column segment / batch)
      w1f  : (C1, K*C_in)              conv1 weight, taps folded into contraction
      w2f  : (C_out, K*C1)             conv2 weight, taps folded into contraction
      wdf  : (C_out, C_in)             optional 1x1 downsample weight
      b*   : (C, 1)                    biases (broadcast along lanes)
      out  : (C_out, b_tile*L)
      x1_scratch : (K*C_in, b_tile*L)  stacked (im2col) operand for conv1
      x2_scratch : (K*C1,  b_tile*L)   stacked (im2col) operand for conv2
    """
    if has_downsample:
        (x_ref, w1_ref, b1_ref, w2_ref, b2_ref, wd_ref, bd_ref,
         o_ref, x1_s, x2_s) = refs
    else:
        x_ref, w1_ref, b1_ref, w2_ref, b2_ref, o_ref, x1_s, x2_s = refs

    n_taps, d, L = kernel_size, dilation, length
    pad = (n_taps - 1) * d

    def stack_rotated(src, dst, n_rows, shift_for_tap):
        """dst[k*n_rows + c, b*L + j] = src[c, b*L + (j - shift_k) mod L].

        Per-tap circular rotation of every batch segment, written straight into
        the stacked im2col VMEM scratch; all static slices, no HBM traffic.
        """
        for k in range(n_taps):
            sh = shift_for_tap(k) % L
            r0, r1 = k * n_rows, (k + 1) * n_rows
            for b in range(b_tile):
                c0 = b * L
                if sh == 0:
                    dst[r0:r1, c0:c0 + L] = src[:, c0:c0 + L]
                else:
                    dst[r0:r1, c0:c0 + sh] = src[:, c0 + L - sh:c0 + L]
                    dst[r0:r1, c0 + sh:c0 + L] = src[:, c0:c0 + L - sh]

    x = x_ref[...]                                        # (C_in, b_tile*L)
    c_in = x.shape[0]
    c1 = w1_ref.shape[0]

    # conv1 + bias + ReLU: a single MXU matmul, contraction depth K*C_in.
    stack_rotated(x, x1_s, c_in, lambda k: pad - k * d)
    y1 = jnp.dot(w1_ref[...], x1_s[...], preferred_element_type=jnp.float32)
    y1 = jnp.maximum(y1 + b1_ref[...], 0.0)               # (C1, b_tile*L)

    # conv2 + bias + ReLU: only the L centered output columns are computed; the
    # centered crop folds into the +k*d circular rotation of y1's core columns.
    stack_rotated(y1, x2_s, c1, lambda k: -k * d)
    y2 = jnp.dot(w2_ref[...], x2_s[...], preferred_element_type=jnp.float32)
    y2 = jnp.maximum(y2 + b2_ref[...], 0.0)               # (C_out, b_tile*L)

    # residual (identity or fused 1x1 conv) + final ReLU, stored lane-dense.
    if has_downsample:
        res = jnp.dot(wd_ref[...], x, preferred_element_type=jnp.float32) + bd_ref[...]
    else:
        res = x
    o_ref[...] = jnp.maximum(y2 + res, 0.0).astype(o_ref.dtype)


# --------------------------- per-block pallas_call ----------------------------

def temporal_block(h, p, *, kernel_size, length, b_tile):
    """h: (C_in, N*L) lane-dense activation slab -> (C_out, N*L)."""
    c_in, total = h.shape
    lane_block = b_tile * length
    assert total % lane_block == 0
    n_tiles = total // lane_block

    c1 = p["w1"].shape[0]
    c_out = p["w2"].shape[0]
    has_down = "wd" in p

    # K-folded, lane-dense weight layout: (C_out, K*C_in); column order is
    # tap-major / channel-minor to match the stacked operand built in-kernel.
    w1f = jnp.transpose(p["w1"], (0, 2, 1)).reshape(c1, kernel_size * c_in)
    w2f = jnp.transpose(p["w2"], (0, 2, 1)).reshape(c_out, kernel_size * c1)
    b1 = p["b1"].reshape(c1, 1)
    b2 = p["b2"].reshape(c_out, 1)

    kernel = functools.partial(
        _temporal_block_kernel, kernel_size=kernel_size, dilation=p["dilation"],
        length=length, b_tile=b_tile, has_downsample=has_down)

    rep = lambda i: (0, 0)                # weights / biases: resident every step
    in_specs = [pl.BlockSpec((c_in, lane_block), lambda i: (0, i)),
                pl.BlockSpec(w1f.shape, rep), pl.BlockSpec(b1.shape, rep),
                pl.BlockSpec(w2f.shape, rep), pl.BlockSpec(b2.shape, rep)]
    args = [h, w1f, b1, w2f, b2]
    if has_down:
        wdf = p["wd"][:, :, 0]
        bd = p["bd"].reshape(c_out, 1)
        in_specs += [pl.BlockSpec(wdf.shape, rep), pl.BlockSpec(bd.shape, rep)]
        args += [wdf, bd]

    return pl.pallas_call(
        kernel,
        out_shape=jax.ShapeDtypeStruct((c_out, total), h.dtype),
        grid=(n_tiles,),
        in_specs=in_specs,
        out_specs=pl.BlockSpec((c_out, lane_block), lambda i: (0, i)),
        scratch_shapes=[
            pltpu.VMEM((kernel_size * c_in, lane_block), jnp.float32),
            pltpu.VMEM((kernel_size * c1, lane_block), jnp.float32)],
        compiler_params=pltpu.CompilerParams(
            dimension_semantics=("parallel",)),
    )(*args)


# --------------------------- TCN forward (glue) ------------------------------

def _pick_b_tile(n, length, max_rows, itemsize=4, slab_budget=4 << 20):
    """Batch elements per grid step.

    The lane block must be either a multiple of 128 lanes (unmasked, lane-dense
    stores) or the full N*L extent.  Per-step slabs are kept small enough to sit
    inside every generation's default scoped-VMEM limit (v5e 16 MiB, v6e/v7x
    32 MiB; v7x physical VMEM is only 64 MiB), so no vmem_limit override needed.
    """
    best = None
    for bt in range(1, n):
        if n % bt == 0 and (bt * length) % 128 == 0:
            if bt * length * max_rows * itemsize <= slab_budget:
                best = bt
    return best if best is not None else n


def temporal_conv_net(x, params, *, kernel_size):
    """TCN forward. x: (N, C_in, L) float32 -> (N, C_last, L)."""
    n, c_in, length = x.shape
    widest = max([c_in] + [int(p["w1"].shape[0]) for p in params])
    b_tile = _pick_b_tile(n, length, (kernel_size + 2) * widest)
    # Lane-dense (C, N*L) activation layout between blocks; one transpose/reshape
    # at entry and exit (layout plumbing only, no per-block HBM round trips).
    h = jnp.transpose(x, (1, 0, 2)).reshape(c_in, n * length)
    for p in params:
        h = temporal_block(h, p, kernel_size=kernel_size, length=length,
                           b_tile=b_tile)
    c_last = h.shape[0]
    return jnp.transpose(h.reshape(c_last, n, length), (1, 0, 2))


# --------------------------- Pure-JAX reference ------------------------------

def circular_pad(x, pad):
    if pad == 0:
        return x
    return jnp.pad(x, ((0, 0), (0, 0), (pad, pad)), mode="wrap")


def _conv_ref(x, w, b, dilation, pad):
    xp = circular_pad(x, pad)
    y = lax.conv_general_dilated(
        xp, w, window_strides=(1,), padding="VALID",
        rhs_dilation=(dilation,), dimension_numbers=("NCH", "OIH", "NCH"),
        precision=lax.Precision.HIGHEST)
    return y + b[None, :, None]


def tcn_ref(x, params, *, kernel_size):
    # Explicit circular pad -> conv -> centered crop, exactly as the PyTorch
    # module computes it (validates the period-L fusion used by the kernel).
    for p in params:
        d = p["dilation"]
        pad = (kernel_size - 1) * d
        length = x.shape[2]
        y1 = jnp.maximum(_conv_ref(x, p["w1"], p["b1"], d, pad), 0.0)
        y2 = jnp.maximum(_conv_ref(y1, p["w2"], p["b2"], d, pad), 0.0)
        idx = (y2.shape[2] - length) // 2
        out = y2[:, :, idx: idx + length]
        res = x if "wd" not in p else _conv_ref(x, p["wd"], p["bd"], 1, 0)
        x = jnp.maximum(out + res, 0.0)
    return x


# ------------------------------ Param init -----------------------------------

def init_params(key, num_inputs, num_channels, kernel_size):
    params = []
    for i, c_out in enumerate(num_channels):
        c_in = num_inputs if i == 0 else num_channels[i - 1]
        dilation = 2 ** i
        if kernel_size * dilation > 672:               # cap from the module
            dilation = int(672 / kernel_size)
        key, k1, k2, k3, k4, k5, k6 = jax.random.split(key, 7)
        p = {
            "dilation": dilation,
            "w1": 0.01 * jax.random.normal(k1, (c_out, c_in, kernel_size), jnp.float32),
            "b1": 0.01 * jax.random.normal(k2, (c_out,), jnp.float32),
            "w2": 0.01 * jax.random.normal(k3, (c_out, c_out, kernel_size), jnp.float32),
            "b2": 0.01 * jax.random.normal(k4, (c_out,), jnp.float32),
        }
        if c_in != c_out:
            p["wd"] = 0.01 * jax.random.normal(k5, (c_out, c_in, 1), jnp.float32)
            p["bd"] = 0.01 * jax.random.normal(k6, (c_out,), jnp.float32)
        params.append(p)
    return params


# --------------------------------- Main ---------------------------------------

if __name__ == "__main__":
    key = jax.random.PRNGKey(0)
    batch, num_inputs, length = 2, 8, 16          # channels multiples of 8 -> sublane aligned
    num_channels = [16, 16]                       # block0 has 1x1 downsample, block1 identity res
    kernel_size = 2

    kx, kp = jax.random.split(key)
    x = jax.random.normal(kx, (batch, num_inputs, length), jnp.float32)
    params = init_params(kp, num_inputs, num_channels, kernel_size)

    fwd = jax.jit(lambda inp: temporal_conv_net(inp, params, kernel_size=kernel_size))
    out = jax.block_until_ready(fwd(x))

    ref = jax.block_until_ready(tcn_ref(x, params, kernel_size=kernel_size))
    np.testing.assert_allclose(np.asarray(out), np.asarray(ref), rtol=1e-4, atol=1e-4)
    assert out.shape == (batch, num_channels[-1], length)

    print("KERNEL_OK")
</pallas_src>

<mosaic_0001>
module attributes {stable_mosaic.version = 11 : i64} {
  func.func @_temporal_block_kernel(%arg0: i32, %arg1: memref<16x32xf32, #tpu.memory_space<vmem>>, %arg2: memref<16x32xf32, #tpu.memory_space<vmem>>, %arg3: memref<16x1xf32, #tpu.memory_space<vmem>>, %arg4: memref<16x32xf32, #tpu.memory_space<vmem>>, %arg5: memref<16x1xf32, #tpu.memory_space<vmem>>, %arg6: memref<16x32xf32, #tpu.memory_space<vmem>>, %arg7: memref<32x32xf32, #tpu.memory_space<vmem>>, %arg8: memref<32x32xf32, #tpu.memory_space<vmem>>) attributes {dimension_semantics = [#tpu.dimension_semantics<parallel>], iteration_bounds = array<i64: 1>, scalar_prefetch = 0 : i64, scratch_operands = 2 : i64, tpu.core_type = #tpu.core_type<tc>, window_params = [{transform_indices = @transform_0, window_bounds = array<i64: 16, 32>}, {pipeline_mode = #tpu.pipeline_mode<synchronous>, transform_indices = @transform_1, window_bounds = array<i64: 16, 32>}, {pipeline_mode = #tpu.pipeline_mode<synchronous>, transform_indices = @transform_2, window_bounds = array<i64: 16, 1>}, {pipeline_mode = #tpu.pipeline_mode<synchronous>, transform_indices = @transform_3, window_bounds = array<i64: 16, 32>}, {pipeline_mode = #tpu.pipeline_mode<synchronous>, transform_indices = @transform_4, window_bounds = array<i64: 16, 1>}, {transform_indices = @transform_5, window_bounds = array<i64: 16, 32>}]} {
    %c0 = arith.constant 0 : index
    %c0_0 = arith.constant 0 : index
    %0 = vector.load %arg1[%c0, %c0_0] : memref<16x32xf32, #tpu.memory_space<vmem>>, vector<16x32xf32>
    %1 = vector.extract_strided_slice %0 {offsets = [0, 14], sizes = [16, 2], strides = [1, 1]} : vector<16x32xf32> to vector<16x2xf32>
    %c0_1 = arith.constant 0 : index
    %c0_2 = arith.constant 0 : index
    %2 = vector.load %arg7[%c0_1, %c0_2] : memref<32x32xf32, #tpu.memory_space<vmem>>, vector<16x2xf32>
    tpu.vector_store %arg7[%c0_1, %c0_2], %1 {strides = array<i32>} : memref<32x32xf32, #tpu.memory_space<vmem>>, vector<16x2xf32>,
    %3 = vector.extract_strided_slice %0 {offsets = [0, 0], sizes = [16, 14], strides = [1, 1]} : vector<16x32xf32> to vector<16x14xf32>
    %c0_3 = arith.constant 0 : index
    %c2 = arith.constant 2 : index
    %4 = vector.load %arg7[%c0_3, %c2] : memref<32x32xf32, #tpu.memory_space<vmem>>, vector<16x14xf32>
    tpu.vector_store %arg7[%c0_3, %c2], %3 {strides = array<i32>} : memref<32x32xf32, #tpu.memory_space<vmem>>, vector<16x14xf32>,
    %5 = vector.extract_strided_slice %0 {offsets = [0, 30], sizes = [16, 2], strides = [1, 1]} : vector<16x32xf32> to vector<16x2xf32>
    %c0_4 = arith.constant 0 : index
    %c16 = arith.constant 16 : index
    %6 = vector.load %arg7[%c0_4, %c16] : memref<32x32xf32, #tpu.memory_space<vmem>>, vector<16x2xf32>
    tpu.vector_store %arg7[%c0_4, %c16], %5 {strides = array<i32>} : memref<32x32xf32, #tpu.memory_space<vmem>>, vector<16x2xf32>,
    %7 = vector.extract_strided_slice %0 {offsets = [0, 16], sizes = [16, 14], strides = [1, 1]} : vector<16x32xf32> to vector<16x14xf32>
    %c0_5 = arith.constant 0 : index
    %c18 = arith.constant 18 : index
    %8 = vector.load %arg7[%c0_5, %c18] : memref<32x32xf32, #tpu.memory_space<vmem>>, vector<16x14xf32>
    tpu.vector_store %arg7[%c0_5, %c18], %7 {strides = array<i32>} : memref<32x32xf32, #tpu.memory_space<vmem>>, vector<16x14xf32>,
    %9 = vector.extract_strided_slice %0 {offsets = [0, 0], sizes = [16, 16], strides = [1, 1]} : vector<16x32xf32> to vector<16x16xf32>
    %c16_6 = arith.constant 16 : index
    %c0_7 = arith.constant 0 : index
    %10 = vector.load %arg7[%c16_6, %c0_7] : memref<32x32xf32, #tpu.memory_space<vmem>>, vector<16x16xf32>
    tpu.vector_store %arg7[%c16_6, %c0_7], %9 {strides = array<i32>} : memref<32x32xf32, #tpu.memory_space<vmem>>, vector<16x16xf32>,
    %11 = vector.extract_strided_slice %0 {offsets = [0, 16], sizes = [16, 16], strides = [1, 1]} : vector<16x32xf32> to vector<16x16xf32>
    %c16_8 = arith.constant 16 : index
    %c16_9 = arith.constant 16 : index
    %12 = vector.load %arg7[%c16_8, %c16_9] : memref<32x32xf32, #tpu.memory_space<vmem>>, vector<16x16xf32>
    tpu.vector_store %arg7[%c16_8, %c16_9], %11 {strides = array<i32>} : memref<32x32xf32, #tpu.memory_space<vmem>>, vector<16x16xf32>,
    %c0_10 = arith.constant 0 : index
    %c0_11 = arith.constant 0 : index
    %13 = vector.load %arg2[%c0_10, %c0_11] : memref<16x32xf32, #tpu.memory_space<vmem>>, vector<16x32xf32>
    %c0_12 = arith.constant 0 : index
    %c0_13 = arith.constant 0 : index
    %14 = vector.load %arg7[%c0_12, %c0_13] : memref<32x32xf32, #tpu.memory_space<vmem>>, vector<32x32xf32>
    %cst = arith.constant dense<0.000000e+00> : vector<16x32xf32>
    %15 = tpu.matmul %13, %14, %cst {dimension_numbers = #tpu.dot_dimension_numbers<[1], [0], [0], [1], [0, 0, 1, 1], [], []>} : vector<16x32xf32>, vector<32x32xf32>, vector<16x32xf32> -> vector<16x32xf32>
    %c0_14 = arith.constant 0 : index
    %c0_15 = arith.constant 0 : index
    %16 = vector.load %arg3[%c0_14, %c0_15] : memref<16x1xf32, #tpu.memory_space<vmem>>, vector<16x1xf32>
    %17 = vector.broadcast %16 : vector<16x1xf32> to vector<16x32xf32>
    %18 = arith.addf %15, %17 : vector<16x32xf32>
    %cst_16 = arith.constant 0.000000e+00 : f32
    %19 = vector.broadcast %cst_16 : f32 to vector<16x32xf32>
    %20 = arith.maximumf %18, %19 : vector<16x32xf32>
    %21 = vector.extract_strided_slice %20 {offsets = [0, 0], sizes = [16, 16], strides = [1, 1]} : vector<16x32xf32> to vector<16x16xf32>
    %c0_17 = arith.constant 0 : index
    %c0_18 = arith.constant 0 : index
    %22 = vector.load %arg8[%c0_17, %c0_18] : memref<32x32xf32, #tpu.memory_space<vmem>>, vector<16x16xf32>
    tpu.vector_store %arg8[%c0_17, %c0_18], %21 {strides = array<i32>} : memref<32x32xf32, #tpu.memory_space<vmem>>, vector<16x16xf32>,
    %23 = vector.extract_strided_slice %20 {offsets = [0, 16], sizes = [16, 16], strides = [1, 1]} : vector<16x32xf32> to vector<16x16xf32>
    %c0_19 = arith.constant 0 : index
    %c16_20 = arith.constant 16 : index
    %24 = vector.load %arg8[%c0_19, %c16_20] : memref<32x32xf32, #tpu.memory_space<vmem>>, vector<16x16xf32>
    tpu.vector_store %arg8[%c0_19, %c16_20], %23 {strides = array<i32>} : memref<32x32xf32, #tpu.memory_space<vmem>>, vector<16x16xf32>,
    %25 = vector.extract_strided_slice %20 {offsets = [0, 2], sizes = [16, 14], strides = [1, 1]} : vector<16x32xf32> to vector<16x14xf32>
    %c16_21 = arith.constant 16 : index
    %c0_22 = arith.constant 0 : index
    %26 = vector.load %arg8[%c16_21, %c0_22] : memref<32x32xf32, #tpu.memory_space<vmem>>, vector<16x14xf32>
    tpu.vector_store %arg8[%c16_21, %c0_22], %25 {strides = array<i32>} : memref<32x32xf32, #tpu.memory_space<vmem>>, vector<16x14xf32>,
    %27 = vector.extract_strided_slice %20 {offsets = [0, 0], sizes = [16, 2], strides = [1, 1]} : vector<16x32xf32> to vector<16x2xf32>
    %c16_23 = arith.constant 16 : index
    %c14 = arith.constant 14 : index
    %28 = vector.load %arg8[%c16_23, %c14] : memref<32x32xf32, #tpu.memory_space<vmem>>, vector<16x2xf32>
    tpu.vector_store %arg8[%c16_23, %c14], %27 {strides = array<i32>} : memref<32x32xf32, #tpu.memory_space<vmem>>, vector<16x2xf32>,
    %29 = vector.extract_strided_slice %20 {offsets = [0, 18], sizes = [16, 14], strides = [1, 1]} : vector<16x32xf32> to vector<16x14xf32>
    %c16_24 = arith.constant 16 : index
    %c16_25 = arith.constant 16 : index
    %30 = vector.load %arg8[%c16_24, %c16_25] : memref<32x32xf32, #tpu.memory_space<vmem>>, vector<16x14xf32>
    tpu.vector_store %arg8[%c16_24, %c16_25], %29 {strides = array<i32>} : memref<32x32xf32, #tpu.memory_space<vmem>>, vector<16x14xf32>,
    %31 = vector.extract_strided_slice %20 {offsets = [0, 16], sizes = [16, 2], strides = [1, 1]} : vector<16x32xf32> to vector<16x2xf32>
    %c16_26 = arith.constant 16 : index
    %c30 = arith.constant 30 : index
    %32 = vector.load %arg8[%c16_26, %c30] : memref<32x32xf32, #tpu.memory_space<vmem>>, vector<16x2xf32>
    tpu.vector_store %arg8[%c16_26, %c30], %31 {strides = array<i32>} : memref<32x32xf32, #tpu.memory_space<vmem>>, vector<16x2xf32>,
    %c0_27 = arith.constant 0 : index
    %c0_28 = arith.constant 0 : index
    %33 = vector.load %arg4[%c0_27, %c0_28] : memref<16x32xf32, #tpu.memory_space<vmem>>, vector<16x32xf32>
    %c0_29 = arith.constant 0 : index
    %c0_30 = arith.constant 0 : index
    %34 = vector.load %arg8[%c0_29, %c0_30] : memref<32x32xf32, #tpu.memory_space<vmem>>, vector<32x32xf32>
    %cst_31 = arith.constant dense<0.000000e+00> : vector<16x32xf32>
    %35 = tpu.matmul %33, %34, %cst_31 {dimension_numbers = #tpu.dot_dimension_numbers<[1], [0], [0], [1], [0, 0, 1, 1], [], []>} : vector<16x32xf32>, vector<32x32xf32>, vector<16x32xf32> -> vector<16x32xf32>
    %c0_32 = arith.constant 0 : index
    %c0_33 = arith.constant 0 : index
    %36 = vector.load %arg5[%c0_32, %c0_33] : memref<16x1xf32, #tpu.memory_space<vmem>>, vector<16x1xf32>
    %37 = vector.broadcast %36 : vector<16x1xf32> to vector<16x32xf32>
    %38 = arith.addf %35, %37 : vector<16x32xf32>
    %cst_34 = arith.constant 0.000000e+00 : f32
    %39 = vector.broadcast %cst_34 : f32 to vector<16x32xf32>
    %40 = arith.maximumf %38, %39 : vector<16x32xf32>
    %41 = arith.addf %40, %0 : vector<16x32xf32>
    %cst_35 = arith.constant 0.000000e+00 : f32
    %42 = vector.broadcast %cst_35 : f32 to vector<16x32xf32>
    %43 = arith.maximumf %41, %42 : vector<16x32xf32>
    %c0_36 = arith.constant 0 : index
    %c0_37 = arith.constant 0 : index
    %44 = vector.load %arg6[%c0_36, %c0_37] : memref<16x32xf32, #tpu.memory_space<vmem>>, vector<16x32xf32>
    tpu.vector_store %arg6[%c0_36, %c0_37], %43 {strides = array<i32>} : memref<16x32xf32, #tpu.memory_space<vmem>>, vector<16x32xf32>,
    return
  }
  func.func @transform_0(%arg0: i32) -> (i32, i32) {
    %c0_i32 = arith.constant 0 : i32
    %c0_i32_0 = arith.constant 0 : i32
    return %c0_i32, %arg0 : i32, i32
  }
  func.func @transform_1(%arg0: i32) -> (i32, i32) {
    %c0_i32 = arith.constant 0 : i32
    %c0_i32_0 = arith.constant 0 : i32
    %c0_i32_1 = arith.constant 0 : i32
    return %c0_i32, %c0_i32_0 : i32, i32
  }
  func.func @transform_2(%arg0: i32) -> (i32, i32) {
    %c0_i32 = arith.constant 0 : i32
    %c0_i32_0 = arith.constant 0 : i32
    %c0_i32_1 = arith.constant 0 : i32
    return %c0_i32, %c0_i32_0 : i32, i32
  }
  func.func @transform_3(%arg0: i32) -> (i32, i32) {
    %c0_i32 = arith.constant 0 : i32
    %c0_i32_0 = arith.constant 0 : i32
    %c0_i32_1 = arith.constant 0 : i32
    return %c0_i32, %c0_i32_0 : i32, i32
  }
  func.func @transform_4(%arg0: i32) -> (i32, i32) {
    %c0_i32 = arith.constant 0 : i32
    %c0_i32_0 = arith.constant 0 : i32
    %c0_i32_1 = arith.constant 0 : i32
    return %c0_i32, %c0_i32_0 : i32, i32
  }
  func.func @transform_5(%arg0: i32) -> (i32, i32) {
    %c0_i32 = arith.constant 0 : i32
    %c0_i32_0 = arith.constant 0 : i32
    return %c0_i32, %arg0 : i32, i32
  }
}

module attributes {stable_mosaic.version = 11 : i64} {
  func.func @_temporal_block_kernel(%arg0: i32, %arg1: memref<8x32xf32, #tpu.memory_space<vmem>>, %arg2: memref<16x16xf32, #tpu.memory_space<vmem>>, %arg3: memref<16x1xf32, #tpu.memory_space<vmem>>, %arg4: memref<16x32xf32, #tpu.memory_space<vmem>>, %arg5: memref<16x1xf32, #tpu.memory_space<vmem>>, %arg6: memref<16x8xf32, #tpu.memory_space<vmem>>, %arg7: memref<16x1xf32, #tpu.memory_space<vmem>>, %arg8: memref<16x32xf32, #tpu.memory_space<vmem>>, %arg9: memref<16x32xf32, #tpu.memory_space<vmem>>, %arg10: memref<32x32xf32, #tpu.memory_space<vmem>>) attributes {dimension_semantics = [#tpu.dimension_semantics<parallel>], iteration_bounds = array<i64: 1>, scalar_prefetch = 0 : i64, scratch_operands = 2 : i64, tpu.core_type = #tpu.core_type<tc>, window_params = [{transform_indices = @transform_0, window_bounds = array<i64: 8, 32>}, {pipeline_mode = #tpu.pipeline_mode<synchronous>, transform_indices = @transform_1, window_bounds = array<i64: 16, 16>}, {pipeline_mode = #tpu.pipeline_mode<synchronous>, transform_indices = @transform_2, window_bounds = array<i64: 16, 1>}, {pipeline_mode = #tpu.pipeline_mode<synchronous>, transform_indices = @transform_3, window_bounds = array<i64: 16, 32>}, {pipeline_mode = #tpu.pipeline_mode<synchronous>, transform_indices = @transform_4, window_bounds = array<i64: 16, 1>}, {pipeline_mode = #tpu.pipeline_mode<synchronous>, transform_indices = @transform_5, window_bounds = array<i64: 16, 8>}, {pipeline_mode = #tpu.pipeline_mode<synchronous>, transform_indices = @transform_6, window_bounds = array<i64: 16, 1>}, {transform_indices = @transform_7, window_bounds = array<i64: 16, 32>}]} {
    %c0 = arith.constant 0 : index
    %c0_0 = arith.constant 0 : index
    %0 = vector.load %arg1[%c0, %c0_0] : memref<8x32xf32, #tpu.memory_space<vmem>>, vector<8x32xf32>
    %1 = vector.extract_strided_slice %0 {offsets = [0, 15], sizes = [8, 1], strides = [1, 1]} : vector<8x32xf32> to vector<8x1xf32>
    %c0_1 = arith.constant 0 : index
    %c0_2 = arith.constant 0 : index
    %2 = vector.load %arg9[%c0_1, %c0_2] : memref<16x32xf32, #tpu.memory_space<vmem>>, vector<8x1xf32>
    tpu.vector_store %arg9[%c0_1, %c0_2], %1 {strides = array<i32>} : memref<16x32xf32, #tpu.memory_space<vmem>>, vector<8x1xf32>,
    %3 = vector.extract_strided_slice %0 {offsets = [0, 0], sizes = [8, 15], strides = [1, 1]} : vector<8x32xf32> to vector<8x15xf32>
    %c0_3 = arith.constant 0 : index
    %c1 = arith.constant 1 : index
    %4 = vector.load %arg9[%c0_3, %c1] : memref<16x32xf32, #tpu.memory_space<vmem>>, vector<8x15xf32>
    tpu.vector_store %arg9[%c0_3, %c1], %3 {strides = array<i32>} : memref<16x32xf32, #tpu.memory_space<vmem>>, vector<8x15xf32>,
    %5 = vector.extract_strided_slice %0 {offsets = [0, 31], sizes = [8, 1], strides = [1, 1]} : vector<8x32xf32> to vector<8x1xf32>
    %c0_4 = arith.constant 0 : index
    %c16 = arith.constant 16 : index
    %6 = vector.load %arg9[%c0_4, %c16] : memref<16x32xf32, #tpu.memory_space<vmem>>, vector<8x1xf32>
    tpu.vector_store %arg9[%c0_4, %c16], %5 {strides = array<i32>} : memref<16x32xf32, #tpu.memory_space<vmem>>, vector<8x1xf32>,
    %7 = vector.extract_strided_slice %0 {offsets = [0, 16], sizes = [8, 15], strides = [1, 1]} : vector<8x32xf32> to vector<8x15xf32>
    %c0_5 = arith.constant 0 : index
    %c17 = arith.constant 17 : index
    %8 = vector.load %arg9[%c0_5, %c17] : memref<16x32xf32, #tpu.memory_space<vmem>>, vector<8x15xf32>
    tpu.vector_store %arg9[%c0_5, %c17], %7 {strides = array<i32>} : memref<16x32xf32, #tpu.memory_space<vmem>>, vector<8x15xf32>,
    %9 = vector.extract_strided_slice %0 {offsets = [0, 0], sizes = [8, 16], strides = [1, 1]} : vector<8x32xf32> to vector<8x16xf32>
    %c8 = arith.constant 8 : index
    %c0_6 = arith.constant 0 : index
    %10 = vector.load %arg9[%c8, %c0_6] : memref<16x32xf32, #tpu.memory_space<vmem>>, vector<8x16xf32>
    tpu.vector_store %arg9[%c8, %c0_6], %9 {strides = array<i32>} : memref<16x32xf32, #tpu.memory_space<vmem>>, vector<8x16xf32>,
    %11 = vector.extract_strided_slice %0 {offsets = [0, 16], sizes = [8, 16], strides = [1, 1]} : vector<8x32xf32> to vector<8x16xf32>
    %c8_7 = arith.constant 8 : index
    %c16_8 = arith.constant 16 : index
    %12 = vector.load %arg9[%c8_7, %c16_8] : memref<16x32xf32, #tpu.memory_space<vmem>>, vector<8x16xf32>
    tpu.vector_store %arg9[%c8_7, %c16_8], %11 {strides = array<i32>} : memref<16x32xf32, #tpu.memory_space<vmem>>, vector<8x16xf32>,
    %c0_9 = arith.constant 0 : index
    %c0_10 = arith.constant 0 : index
    %13 = vector.load %arg2[%c0_9, %c0_10] : memref<16x16xf32, #tpu.memory_space<vmem>>, vector<16x16xf32>
    %c0_11 = arith.constant 0 : index
    %c0_12 = arith.constant 0 : index
    %14 = vector.load %arg9[%c0_11, %c0_12] : memref<16x32xf32, #tpu.memory_space<vmem>>, vector<16x32xf32>
    %cst = arith.constant dense<0.000000e+00> : vector<16x32xf32>
    %15 = tpu.matmul %13, %14, %cst {dimension_numbers = #tpu.dot_dimension_numbers<[1], [0], [0], [1], [0, 0, 1, 1], [], []>} : vector<16x16xf32>, vector<16x32xf32>, vector<16x32xf32> -> vector<16x32xf32>
    %c0_13 = arith.constant 0 : index
    %c0_14 = arith.constant 0 : index
    %16 = vector.load %arg3[%c0_13, %c0_14] : memref<16x1xf32, #tpu.memory_space<vmem>>, vector<16x1xf32>
    %17 = vector.broadcast %16 : vector<16x1xf32> to vector<16x32xf32>
    %18 = arith.addf %15, %17 : vector<16x32xf32>
    %cst_15 = arith.constant 0.000000e+00 : f32
    %19 = vector.broadcast %cst_15 : f32 to vector<16x32xf32>
    %20 = arith.maximumf %18, %19 : vector<16x32xf32>
    %21 = vector.extract_strided_slice %20 {offsets = [0, 0], sizes = [16, 16], strides = [1, 1]} : vector<16x32xf32> to vector<16x16xf32>
    %c0_16 = arith.constant 0 : index
    %c0_17 = arith.constant 0 : index
    %22 = vector.load %arg10[%c0_16, %c0_17] : memref<32x32xf32, #tpu.memory_space<vmem>>, vector<16x16xf32>
    tpu.vector_store %arg10[%c0_16, %c0_17], %21 {strides = array<i32>} : memref<32x32xf32, #tpu.memory_space<vmem>>, vector<16x16xf32>,
    %23 = vector.extract_strided_slice %20 {offsets = [0, 16], sizes = [16, 16], strides = [1, 1]} : vector<16x32xf32> to vector<16x16xf32>
    %c0_18 = arith.constant 0 : index
    %c16_19 = arith.constant 16 : index
    %24 = vector.load %arg10[%c0_18, %c16_19] : memref<32x32xf32, #tpu.memory_space<vmem>>, vector<16x16xf32>
    tpu.vector_store %arg10[%c0_18, %c16_19], %23 {strides = array<i32>} : memref<32x32xf32, #tpu.memory_space<vmem>>, vector<16x16xf32>,
    %25 = vector.extract_strided_slice %20 {offsets = [0, 1], sizes = [16, 15], strides = [1, 1]} : vector<16x32xf32> to vector<16x15xf32>
    %c16_20 = arith.constant 16 : index
    %c0_21 = arith.constant 0 : index
    %26 = vector.load %arg10[%c16_20, %c0_21] : memref<32x32xf32, #tpu.memory_space<vmem>>, vector<16x15xf32>
    tpu.vector_store %arg10[%c16_20, %c0_21], %25 {strides = array<i32>} : memref<32x32xf32, #tpu.memory_space<vmem>>, vector<16x15xf32>,
    %27 = vector.extract_strided_slice %20 {offsets = [0, 0], sizes = [16, 1], strides = [1, 1]} : vector<16x32xf32> to vector<16x1xf32>
    %c16_22 = arith.constant 16 : index
    %c15 = arith.constant 15 : index
    %28 = vector.load %arg10[%c16_22, %c15] : memref<32x32xf32, #tpu.memory_space<vmem>>, vector<16x1xf32>
    tpu.vector_store %arg10[%c16_22, %c15], %27 {strides = array<i32>} : memref<32x32xf32, #tpu.memory_space<vmem>>, vector<16x1xf32>,
    %29 = vector.extract_strided_slice %20 {offsets = [0, 17], sizes = [16, 15], strides = [1, 1]} : vector<16x32xf32> to vector<16x15xf32>
    %c16_23 = arith.constant 16 : index
    %c16_24 = arith.constant 16 : index
    %30 = vector.load %arg10[%c16_23, %c16_24] : memref<32x32xf32, #tpu.memory_space<vmem>>, vector<16x15xf32>
    tpu.vector_store %arg10[%c16_23, %c16_24], %29 {strides = array<i32>} : memref<32x32xf32, #tpu.memory_space<vmem>>, vector<16x15xf32>,
    %31 = vector.extract_strided_slice %20 {offsets = [0, 16], sizes = [16, 1], strides = [1, 1]} : vector<16x32xf32> to vector<16x1xf32>
    %c16_25 = arith.constant 16 : index
    %c31 = arith.constant 31 : index
    %32 = vector.load %arg10[%c16_25, %c31] : memref<32x32xf32, #tpu.memory_space<vmem>>, vector<16x1xf32>
    tpu.vector_store %arg10[%c16_25, %c31], %31 {strides = array<i32>} : memref<32x32xf32, #tpu.memory_space<vmem>>, vector<16x1xf32>,
    %c0_26 = arith.constant 0 : index
    %c0_27 = arith.constant 0 : index
    %33 = vector.load %arg4[%c0_26, %c0_27] : memref<16x32xf32, #tpu.memory_space<vmem>>, vector<16x32xf32>
    %c0_28 = arith.constant 0 : index
    %c0_29 = arith.constant 0 : index
    %34 = vector.load %arg10[%c0_28, %c0_29] : memref<32x32xf32, #tpu.memory_space<vmem>>, vector<32x32xf32>
    %cst_30 = arith.constant dense<0.000000e+00> : vector<16x32xf32>
    %35 = tpu.matmul %33, %34, %cst_30 {dimension_numbers = #tpu.dot_dimension_numbers<[1], [0], [0], [1], [0, 0, 1, 1], [], []>} : vector<16x32xf32>, vector<32x32xf32>, vector<16x32xf32> -> vector<16x32xf32>
    %c0_31 = arith.constant 0 : index
    %c0_32 = arith.constant 0 : index
    %36 = vector.load %arg5[%c0_31, %c0_32] : memref<16x1xf32, #tpu.memory_space<vmem>>, vector<16x1xf32>
    %37 = vector.broadcast %36 : vector<16x1xf32> to vector<16x32xf32>
    %38 = arith.addf %35, %37 : vector<16x32xf32>
    %cst_33 = arith.constant 0.000000e+00 : f32
    %39 = vector.broadcast %cst_33 : f32 to vector<16x32xf32>
    %40 = arith.maximumf %38, %39 : vector<16x32xf32>
    %c0_34 = arith.constant 0 : index
    %c0_35 = arith.constant 0 : index
    %41 = vector.load %arg6[%c0_34, %c0_35] : memref<16x8xf32, #tpu.memory_space<vmem>>, vector<16x8xf32>
    %cst_36 = arith.constant dense<0.000000e+00> : vector<16x32xf32>
    %42 = tpu.matmul %41, %0, %cst_36 {dimension_numbers = #tpu.dot_dimension_numbers<[1], [0], [0], [1], [0, 0, 1, 1], [], []>} : vector<16x8xf32>, vector<8x32xf32>, vector<16x32xf32> -> vector<16x32xf32>
    %c0_37 = arith.constant 0 : index
    %c0_38 = arith.constant 0 : index
    %43 = vector.load %arg7[%c0_37, %c0_38] : memref<16x1xf32, #tpu.memory_space<vmem>>, vector<16x1xf32>
    %44 = vector.broadcast %43 : vector<16x1xf32> to vector<16x32xf32>
    %45 = arith.addf %42, %44 : vector<16x32xf32>
    %46 = arith.addf %40, %45 : vector<16x32xf32>
    %cst_39 = arith.constant 0.000000e+00 : f32
    %47 = vector.broadcast %cst_39 : f32 to vector<16x32xf32>
    %48 = arith.maximumf %46, %47 : vector<16x32xf32>
    %c0_40 = arith.constant 0 : index
    %c0_41 = arith.constant 0 : index
    %49 = vector.load %arg8[%c0_40, %c0_41] : memref<16x32xf32, #tpu.memory_space<vmem>>, vector<16x32xf32>
    tpu.vector_store %arg8[%c0_40, %c0_41], %48 {strides = array<i32>} : memref<16x32xf32, #tpu.memory_space<vmem>>, vector<16x32xf32>,
    return
  }
  func.func @transform_0(%arg0: i32) -> (i32, i32) {
    %c0_i32 = arith.constant 0 : i32
    %c0_i32_0 = arith.constant 0 : i32
    return %c0_i32, %arg0 : i32, i32
  }
  func.func @transform_1(%arg0: i32) -> (i32, i32) {
    %c0_i32 = arith.constant 0 : i32
    %c0_i32_0 = arith.constant 0 : i32
    %c0_i32_1 = arith.constant 0 : i32
    return %c0_i32, %c0_i32_0 : i32, i32
  }
  func.func @transform_2(%arg0: i32) -> (i32, i32) {
    %c0_i32 = arith.constant 0 : i32
    %c0_i32_0 = arith.constant 0 : i32
    %c0_i32_1 = arith.constant 0 : i32
    return %c0_i32, %c0_i32_0 : i32, i32
  }
  func.func @transform_3(%arg0: i32) -> (i32, i32) {
    %c0_i32 = arith.constant 0 : i32
    %c0_i32_0 = arith.constant 0 : i32
    %c0_i32_1 = arith.constant 0 : i32
    return %c0_i32, %c0_i32_0 : i32, i32
  }
  func.func @transform_4(%arg0: i32) -> (i32, i32) {
    %c0_i32 = arith.constant 0 : i32
    %c0_i32_0 = arith.constant 0 : i32
    %c0_i32_1 = arith.constant 0 : i32
    return %c0_i32, %c0_i32_0 : i32, i32
  }
  func.func @transform_5(%arg0: i32) -> (i32, i32) {
    %c0_i32 = arith.constant 0 : i32
    %c0_i32_0 = arith.constant 0 : i32
    %c0_i32_1 = arith.constant 0 : i32
    return %c0_i32, %c0_i32_0 : i32, i32
  }
  func.func @transform_6(%arg0: i32) -> (i32, i32) {
    %c0_i32 = arith.constant 0 : i32
    %c0_i32_0 = arith.constant 0 : i32
    %c0_i32_1 = arith.constant 0 : i32
    return %c0_i32, %c0_i32_0 : i32, i32
  }
  func.func @transform_7(%arg0: i32) -> (i32, i32) {
    %c0_i32 = arith.constant 0 : i32
    %c0_i32_0 = arith.constant 0 : i32
    return %c0_i32, %arg0 : i32, i32
  }
}

</mosaic_0001>

<llo_original>
// kernel: _lambda_.3
$region0: #{_lambda_.3}
  #allocation0 [shape = 'u32[]', space=smem, size = 0x4, offset = 0x4, fixed_abs, tag = 'smem constant byte address 0x4 - core index']
  #allocation1 [shape = 'u32[144,128]{1,0:T(1,128)}', space=vmem, size = 0x12000, scoped, tag = 'internal scratch']
  #allocation2 [shape = 'f32[32,32]{1,0:T(8,128)}', space=vmem, size = 0x4000, scoped, tag = 'scratch operand']
  #allocation3 [shape = 'f32[32,32]{1,0:T(8,128)}', space=vmem, size = 0x4000, scoped, tag = 'scratch operand']
  %s0 = inlined_call_operand.vmem [shape: f32[16,32], index: 0, kind: input, shape index: {}]
  %s1 = inlined_call_operand.vmem [shape: f32[16,32], index: 1, kind: input, shape index: {}]
  %s2 = inlined_call_operand.vmem [shape: f32[16,1], index: 2, kind: input, shape index: {}]
  %s3 = inlined_call_operand.vmem [shape: f32[16,32], index: 3, kind: input, shape index: {}]
  %s4 = inlined_call_operand.vmem [shape: f32[16,1], index: 4, kind: input, shape index: {}]
  %s5 = inlined_call_operand.vmem [shape: f32[16,32], index: 5, kind: output, shape index: {}]
  %s6 = sld [smem:[#allocation0]]
  $region30: #{_lambda_.3} parent=0
    _
  %s8 = ssub.s32 1, %s6
  %s9 = scalar_select 0, %s8, %s6
  // Predicated region
  $region2: #{_lambda_.3} parent=0 // pred_check
    _
  $region3: #{_lambda_.3} parent=0 // pred_check_branch
    %11 = sbr.rel (0) target = $region5
  $region4: #{_lambda_.3} parent=0 // pred_region
    _
  $region5: #{_lambda_.3} parent=0 // pred_fallthru
    _
  // Predicated region
  $region6: #{_lambda_.3} parent=0 // pred_check
    _
  $region7: #{_lambda_.3} parent=0 // pred_check_branch
    %13 = sbr.rel (0) target = $region9
  $region8: #{_lambda_.3} parent=0 // pred_region
    _
  $region9: #{_lambda_.3} parent=0 // pred_fallthru
    _
  // Predicated region
  $region10: #{_lambda_.3} parent=0 // pred_check
    _
  $region11: #{_lambda_.3} parent=0 // pred_check_branch
    %15 = sbr.rel (0) target = $region13
  $region12: #{_lambda_.3} parent=0 // pred_region
    _
  $region13: #{_lambda_.3} parent=0 // pred_fallthru
    _
  // Predicated region
  $region14: #{_lambda_.3} parent=0 // pred_check
    _
  $region15: #{_lambda_.3} parent=0 // pred_check_branch
    %17 = sbr.rel (0) target = $region17
  $region16: #{_lambda_.3} parent=0 // pred_region
    _
  $region17: #{_lambda_.3} parent=0 // pred_fallthru
    _
  // Predicated region
  $region18: #{_lambda_.3} parent=0 // pred_check
    _
  $region19: #{_lambda_.3} parent=0 // pred_check_branch
    %19 = sbr.rel (0) target = $region21
  $region20: #{_lambda_.3} parent=0 // pred_region
    _
  $region21: #{_lambda_.3} parent=0 // pred_fallthru
    _
  %v20 = vld [vmem:[%s0] sm:$0xff]
  %v21 = vld [vmem:[%s0 + $0x8] sm:$0xff]
  %24 = vrot.lane.b32.xlu0 %v20, 114
  %v25 = vpop.permute.xlu0 %24
  %26 = vrot.lane.b32.xlu0 %v21, 114
  %v27 = vpop.permute.xlu0 %26
  %vm30 = vcmask 15360
  %31 = vst.msk [vmem:[#allocation2] sm:$0xff] %vm30, %v25
  %32 = vst.msk [vmem:[#allocation2 + $0x8] sm:$0xff] %vm30, %v27
  %33 = vrot.lane.b32.xlu0 %v20, 2
  %v34 = vpop.permute.xlu0 %33
  %35 = vrot.lane.b32.xlu0 %v21, 2
  %v36 = vpop.permute.xlu0 %35
  %vm39 = vcmask 130064
  %40 = vst.msk [vmem:[#allocation2] sm:$0xff] %vm39, %v34
  %41 = vst.msk [vmem:[#allocation2 + $0x8] sm:$0xff] %vm39, %v36
  %vm42 = vcmask 146560
  %43 = vst.msk [vmem:[#allocation2] sm:$0xff] %vm42, %v25
  %44 = vst.msk [vmem:[#allocation2 + $0x8] sm:$0xff] %vm42, %v27
  %vm45 = vcmask 261264
  %46 = vst.msk [vmem:[#allocation2] sm:$0xff] %vm45, %v34
  %47 = vst.msk [vmem:[#allocation2 + $0x8] sm:$0xff] %vm45, %v36
  %vm48 = vcmask 130048
  %49 = vst.msk [vmem:[#allocation2 + $0x10] sm:$0xff] %vm48, %v20
  %50 = vst.msk [vmem:[#allocation2 + $0x18] sm:$0xff] %vm48, %v21
  %vm51 = vcmask 261248
  %52 = vst.msk [vmem:[#allocation2 + $0x10] sm:$0xff] %vm51, %v20
  %53 = vst.msk [vmem:[#allocation2 + $0x18] sm:$0xff] %vm51, %v21
  %v54 = vld [vmem:[%s1] sm:$0xff]
  %v55 = vld [vmem:[%s1 + $0x8] sm:$0xff]
  %v56 = vld [vmem:[#allocation2] sm:$0xff]
  %v57 = vld [vmem:[#allocation2 + $0x8] sm:$0xff]
  %v58 = vld [vmem:[#allocation2 + $0x10] sm:$0xff]
  %v59 = vld [vmem:[#allocation2 + $0x18] sm:$0xff]
  %v60 = vld [vmem:[%s2] sm:$0xff]
  %v61 = vld [vmem:[%s2 + $0x8] sm:$0xff]
  %63 = vset.pattern.permute.xlu0 0
  %64 = vperm.xlu0 %63, %v60
  %v65 = vpop.permute.xlu0 %64
  %68 = vset.pattern.permute.xlu0 0
  %69 = vperm.xlu0 %68, %v61
  %v70 = vpop.permute.xlu0 %69
  %vm72 = vcmask 261120
  %v74 = vsel %vm72, %v54, 0
  %v77 = vsel %vm72, %v55, 0
  %79 = vmatprep.subr.mxu0 0.0
  %80 = vmatpush1.msra.mxu0 %v56
  %81 = vmatprep.subr.mxu0 0.0
  %82 = vmatpush1.msra.mxu0 %v57
  %83 = vmatprep.subr.mxu0 0.0
  %84 = vmatpush1.msra.mxu0 %v58
  %85 = vmatprep.subr.mxu0 0.0
  %86 = vmatpush1.msra.mxu0 %v59
  %87 = vmatprep.subr.mxu0 0.0
  %88 = vmatpush1.msra.mxu0 0.0
  %89 = vmatprep.subr.mxu0 0.0
  %90 = vmatpush1.msra.mxu0 0.0
  %91 = vmatprep.subr.mxu0 0.0
  %92 = vmatpush1.msra.mxu0 0.0
  %93 = vmatprep.subr.mxu0 0.0
  %94 = vmatpush1.msra.mxu0 0.0
  %95 = vmatprep.subr.mxu0 0.0
  %96 = vmatpush1.msra.mxu0 0.0
  %97 = vmatprep.subr.mxu0 0.0
  %98 = vmatpush1.msra.mxu0 0.0
  %99 = vmatprep.subr.mxu0 0.0
  %100 = vmatpush1.msra.mxu0 0.0
  %101 = vmatprep.subr.mxu0 0.0
  %102 = vmatpush1.msra.mxu0 0.0
  %103 = vmatprep.subr.mxu0 0.0
  %104 = vmatpush1.msra.mxu0 0.0
  %105 = vmatprep.subr.mxu0 0.0
  %106 = vmatpush1.msra.mxu0 0.0
  %107 = vmatprep.subr.mxu0 0.0
  %108 = vmatpush1.msra.mxu0 0.0
  %109 = vmatprep.subr.mxu0 0.0
  %110 = vmatpush1.msra.mxu0 0.0
  %111 = vmatprep.subr.mxu0 0.0
  %112 = vmatpush1.msra.mxu0 0.0
  %113 = vmatprep.subr.mxu0 0.0
  %114 = vmatpush1.msra.mxu0 0.0
  %115 = vmatprep.subr.mxu0 0.0
  %116 = vmatpush1.msra.mxu0 0.0
  %117 = vmatprep.subr.mxu0 0.0
  %118 = vmatpush1.msra.mxu0 0.0
  %119 = vmatprep.subr.mxu0 0.0
  %120 = vmatpush1.msra.mxu0 0.0
  %121 = vmatprep.subr.mxu0 0.0
  %122 = vmatpush1.msra.mxu0 0.0
  %123 = vmatprep.subr.mxu0 0.0
  %124 = vmatpush1.msra.mxu0 0.0
  %125 = vmatprep.subr.mxu0 0.0
  %126 = vmatpush1.msra.mxu0 0.0
  %127 = vmatprep.subr.mxu0 0.0
  %128 = vmatpush1.msra.mxu0 0.0
  %129 = vmatprep.subr.mxu0 0.0
  %130 = vmatpush1.msra.mxu0 0.0
  %131 = vmatprep.subr.mxu0 0.0
  %132 = vmatpush1.msra.mxu0 0.0
  %133 = vmatprep.subr.mxu0 0.0
  %134 = vmatpush1.msra.mxu0 0.0
  %135 = vmatprep.subr.mxu0 0.0
  %136 = vmatpush1.msra.mxu0 0.0
  %137 = vmatprep.subr.mxu0 0.0
  %138 = vmatpush1.msra.mxu0 0.0
  %139 = vmatprep.subr.mxu0 0.0
  %140 = vmatpush1.msra.mxu0 0.0
  %141 = vmatprep.subr.mxu0 0.0
  %142 = vmatpush1.msra.mxu0 0.0
  %143 = vmatprep.mubr.f32.mxu0 0.0
  %144 = vmatmul.mubr.f32.gmra.mrb[0].mxu0 %v74
  %v145 = vpop.f32.mrb[0].mxu0
  %v146 = vadd.f32 %v65, %v145
  %v147 = vpop.f32.mrb[0].mxu0
  %148 = vmatprep.mubr.f32.mxu0 0.0
  %149 = vmatmul.mubr.f32.gmra.mrb[0].mxu0 %v77
  %v150 = vpop.f32.mrb[0].mxu0
  %v151 = vadd.f32 %v70, %v150
  %v152 = vpop.f32.mrb[0].mxu0
  %153 = vdwg.mxu0
  %v154 = vmax.f32 %v146, 0.0
  %v155 = vmax.f32 %v151, 0.0
  %156 = vst.msk [vmem:[#allocation3] sm:$0xff] %vm48, %v154
  %157 = vst.msk [vmem:[#allocation3 + $0x8] sm:$0xff] %vm48, %v155
  %158 = vst.msk [vmem:[#allocation3] sm:$0xff] %vm51, %v154
  %159 = vst.msk [vmem:[#allocation3 + $0x8] sm:$0xff] %vm51, %v155
  %162 = vrot.lane.b32.xlu0 %v154, 126
  %v163 = vpop.permute.xlu0 %162
  %164 = vrot.lane.b32.xlu0 %v155, 126
  %v165 = vpop.permute.xlu0 %164
  %vm168 = vcmask 113664
  %169 = vst.msk [vmem:[#allocation3 + $0x10] sm:$0xff] %vm168, %v163
  %170 = vst.msk [vmem:[#allocation3 + $0x18] sm:$0xff] %vm168, %v165
  %171 = vrot.lane.b32.xlu0 %v154, 14
  %v172 = vpop.permute.xlu0 %171
  %173 = vrot.lane.b32.xlu0 %v155, 14
  %v174 = vpop.permute.xlu0 %173
  %vm177 = vcmask 130160
  %178 = vst.msk [vmem:[#allocation3 + $0x10] sm:$0xff] %vm177, %v172
  %179 = vst.msk [vmem:[#allocation3 + $0x18] sm:$0xff] %vm177, %v174
  %vm180 = vcmask 244864
  %181 = vst.msk [vmem:[#allocation3 + $0x10] sm:$0xff] %vm180, %v163
  %182 = vst.msk [vmem:[#allocation3 + $0x18] sm:$0xff] %vm180, %v165
  %vm183 = vcmask 261360
  %184 = vst.msk [vmem:[#allocation3 + $0x10] sm:$0xff] %vm183, %v172
  %185 = vst.msk [vmem:[#allocation3 + $0x18] sm:$0xff] %vm183, %v174
  %v186 = vld [vmem:[%s3] sm:$0xff]
  %v187 = vld [vmem:[%s3 + $0x8] sm:$0xff]
  %v188 = vld [vmem:[#allocation3] sm:$0xff]
  %v189 = vld [vmem:[#allocation3 + $0x8] sm:$0xff]
  %v190 = vld [vmem:[#allocation3 + $0x10] sm:$0xff]
  %v191 = vld [vmem:[#allocation3 + $0x18] sm:$0xff]
  %v192 = vld [vmem:[%s4] sm:$0xff]
  %v193 = vld [vmem:[%s4 + $0x8] sm:$0xff]
  %195 = vset.pattern.permute.xlu0 0
  %196 = vperm.xlu0 %195, %v192
  %v197 = vpop.permute.xlu0 %196
  %200 = vset.pattern.permute.xlu0 0
  %201 = vperm.xlu0 %200, %v193
  %v202 = vpop.permute.xlu0 %201
  %v205 = vsel %vm72, %v186, 0
  %v208 = vsel %vm72, %v187, 0
  %210 = vmatprep.subr.mxu0 0.0
  %211 = vmatpush1.msra.mxu0 %v188
  %212 = vmatprep.subr.mxu0 0.0
  %213 = vmatpush1.msra.mxu0 %v189
  %214 = vmatprep.subr.mxu0 0.0
  %215 = vmatpush1.msra.mxu0 %v190
  %216 = vmatprep.subr.mxu0 0.0
  %217 = vmatpush1.msra.mxu0 %v191
  %218 = vmatprep.subr.mxu0 0.0
  %219 = vmatpush1.msra.mxu0 0.0
  %220 = vmatprep.subr.mxu0 0.0
  %221 = vmatpush1.msra.mxu0 0.0
  %222 = vmatprep.subr.mxu0 0.0
  %223 = vmatpush1.msra.mxu0 0.0
  %224 = vmatprep.subr.mxu0 0.0
  %225 = vmatpush1.msra.mxu0 0.0
  %226 = vmatprep.subr.mxu0 0.0
  %227 = vmatpush1.msra.mxu0 0.0
  %228 = vmatprep.subr.mxu0 0.0
  %229 = vmatpush1.msra.mxu0 0.0
  %230 = vmatprep.subr.mxu0 0.0
  %231 = vmatpush1.msra.mxu0 0.0
  %232 = vmatprep.subr.mxu0 0.0
  %233 = vmatpush1.msra.mxu0 0.0
  %234 = vmatprep.subr.mxu0 0.0
  %235 = vmatpush1.msra.mxu0 0.0
  %236 = vmatprep.subr.mxu0 0.0
  %237 = vmatpush1.msra.mxu0 0.0
  %238 = vmatprep.subr.mxu0 0.0
  %239 = vmatpush1.msra.mxu0 0.0
  %240 = vmatprep.subr.mxu0 0.0
  %241 = vmatpush1.msra.mxu0 0.0
  %242 = vmatprep.subr.mxu0 0.0
  %243 = vmatpush1.msra.mxu0 0.0
  %244 = vmatprep.subr.mxu0 0.0
  %245 = vmatpush1.msra.mxu0 0.0
  %246 = vmatprep.subr.mxu0 0.0
  %247 = vmatpush1.msra.mxu0 0.0
  %248 = vmatprep.subr.mxu0 0.0
  %249 = vmatpush1.msra.mxu0 0.0
  %250 = vmatprep.subr.mxu0 0.0
  %251 = vmatpush1.msra.mxu0 0.0
  %252 = vmatprep.subr.mxu0 0.0
  %253 = vmatpush1.msra.mxu0 0.0
  %254 = vmatprep.subr.mxu0 0.0
  %255 = vmatpush1.msra.mxu0 0.0
  %256 = vmatprep.subr.mxu0 0.0
  %257 = vmatpush1.msra.mxu0 0.0
  %258 = vmatprep.subr.mxu0 0.0
  %259 = vmatpush1.msra.mxu0 0.0
  %260 = vmatprep.subr.mxu0 0.0
  %261 = vmatpush1.msra.mxu0 0.0
  %262 = vmatprep.subr.mxu0 0.0
  %263 = vmatpush1.msra.mxu0 0.0
  %264 = vmatprep.subr.mxu0 0.0
  %265 = vmatpush1.msra.mxu0 0.0
  %266 = vmatprep.subr.mxu0 0.0
  %267 = vmatpush1.msra.mxu0 0.0
  %268 = vmatprep.subr.mxu0 0.0
  %269 = vmatpush1.msra.mxu0 0.0
  %270 = vmatprep.subr.mxu0 0.0
  %271 = vmatpush1.msra.mxu0 0.0
  %272 = vmatprep.subr.mxu0 0.0
  %273 = vmatpush1.msra.mxu0 0.0
  %274 = vmatprep.mubr.f32.mxu0 0.0
  %275 = vmatmul.mubr.f32.gmra.mrb[0].mxu0 %v205
  %v276 = vpop.f32.mrb[0].mxu0
  %v277 = vadd.f32 %v197, %v276
  %v278 = vpop.f32.mrb[0].mxu0
  %279 = vmatprep.mubr.f32.mxu0 0.0
  %280 = vmatmul.mubr.f32.gmra.mrb[0].mxu0 %v208
  %v281 = vpop.f32.mrb[0].mxu0
  %v282 = vadd.f32 %v202, %v281
  %v283 = vpop.f32.mrb[0].mxu0
  %284 = vdwg.mxu0
  %v285 = vmax.f32 %v277, 0.0
  %v286 = vmax.f32 %v282, 0.0
  %v287 = vadd.f32 %v285, %v20
  %v288 = vadd.f32 %v286, %v21
  %v289 = vmax.f32 %v287, 0.0
  %v290 = vmax.f32 %v288, 0.0
  %291 = vst.msk [vmem:[%s5] sm:$0xff] %vm72, %v289
  %292 = vst.msk [vmem:[%s5 + $0x8] sm:$0xff] %vm72, %v290
  // Predicated region
  $region22: #{_lambda_.3} parent=0 // pred_check
    _
  $region23: #{_lambda_.3} parent=0 // pred_check_branch
    %294 = sbr.rel (0) target = $region25
  $region24: #{_lambda_.3} parent=0 // pred_region
    _
  $region25: #{_lambda_.3} parent=0 // pred_fallthru
    _
  // Predicated region
  $region26: #{_lambda_.3} parent=0 // pred_check
    _
  $region27: #{_lambda_.3} parent=0 // pred_check_branch
    %296 = sbr.rel (0) target = $region29
  $region28: #{_lambda_.3} parent=0 // pred_region
    _
  $region29: #{_lambda_.3} parent=0 // pred_fallthru
    _

// kernel: _lambda_.2
$region0: #{_lambda_.2}
  #allocation0 [shape = 'u32[]', space=smem, size = 0x4, offset = 0x4, fixed_abs, tag = 'smem constant byte address 0x4 - core index']
  #allocation1 [shape = 'u32[144,128]{1,0:T(1,128)}', space=vmem, size = 0x12000, scoped, tag = 'internal scratch']
  #allocation2 [shape = 'f32[16,32]{1,0:T(8,128)}', space=vmem, size = 0x2000, scoped, tag = 'scratch operand']
  #allocation3 [shape = 'f32[32,32]{1,0:T(8,128)}', space=vmem, size = 0x4000, scoped, tag = 'scratch operand']
  %s0 = inlined_call_operand.vmem [shape: f32[8,32], index: 0, kind: input, shape index: {}]
  %s1 = inlined_call_operand.vmem [shape: f32[16,16], index: 1, kind: input, shape index: {}]
  %s2 = inlined_call_operand.vmem [shape: f32[16,1], index: 2, kind: input, shape index: {}]
  %s3 = inlined_call_operand.vmem [shape: f32[16,32], index: 3, kind: input, shape index: {}]
  %s4 = inlined_call_operand.vmem [shape: f32[16,1], index: 4, kind: input, shape index: {}]
  %s5 = inlined_call_operand.vmem [shape: f32[16,8], index: 5, kind: input, shape index: {}]
  %s6 = inlined_call_operand.hbm [shape: f32[16,1], index: 6, kind: input, shape index: {}]
  %s7 = inlined_call_operand.vmem [shape: f32[16,32], index: 7, kind: output, shape index: {}]
  %s8 = sld [smem:[#allocation0]]
  $region42: #{_lambda_.2} parent=0
    _
  %s10 = ssub.s32 1, %s8
  %s11 = scalar_select 0, %s10, %s8
  $region1: #{_lambda_.2} parent=0
    #allocation4 [shape = 'u8[8192]{0}', space=vmem, size = 0x2000, scoped, tag = 'input window, operand 6, single buffered']
    #allocation5 [shape = 's32[1]{0}', space=sflag, size = 0x4, scoped, tag = 'scoped memory for _lambda_.2']
    %12 = vsyncpa [#allocation5], 0
    // Predicated region
    $region2: #{_lambda_.2} parent=1 // pred_check
      _
    $region3: #{_lambda_.2} parent=1 // pred_check_branch
      %14 = sbr.rel (0) target = $region5
    $region4: #{_lambda_.2} parent=1 // pred_region
      _
    $region5: #{_lambda_.2} parent=1 // pred_fallthru
      _
    // Predicated region
    $region6: #{_lambda_.2} parent=1 // pred_check
      _
    $region7: #{_lambda_.2} parent=1 // pred_check_branch
      %16 = sbr.rel (0) target = $region9
    $region8: #{_lambda_.2} parent=1 // pred_region
      _
    $region9: #{_lambda_.2} parent=1 // pred_fallthru
      _
    // Predicated region
    $region10: #{_lambda_.2} parent=1 // pred_check
      _
    $region11: #{_lambda_.2} parent=1 // pred_check_branch
      %18 = sbr.rel (0) target = $region13
    $region12: #{_lambda_.2} parent=1 // pred_region
      _
    $region13: #{_lambda_.2} parent=1 // pred_fallthru
      _
    // Predicated region
    $region14: #{_lambda_.2} parent=1 // pred_check
      _
    $region15: #{_lambda_.2} parent=1 // pred_check_branch
      %20 = sbr.rel (0) target = $region17
    $region16: #{_lambda_.2} parent=1 // pred_region
      _
    $region17: #{_lambda_.2} parent=1 // pred_fallthru
      _
    // Predicated region
    $region18: #{_lambda_.2} parent=1 // pred_check
      _
    $region19: #{_lambda_.2} parent=1 // pred_check_branch
      %22 = sbr.rel (0) target = $region21
    $region20: #{_lambda_.2} parent=1 // pred_region
      _
    $region21: #{_lambda_.2} parent=1 // pred_fallthru
      _
    // Predicated region
    $region22: #{_lambda_.2} parent=1 // pred_check
      _
    $region23: #{_lambda_.2} parent=1 // pred_check_branch
      %24 = sbr.rel (0) target = $region25
    $region24: #{_lambda_.2} parent=1 // pred_region
      _
    $region25: #{_lambda_.2} parent=1 // pred_fallthru
      _
    // Predicated region
    $region26: #{_lambda_.2} parent=1 // pred_check
      _
    $region27: #{_lambda_.2} parent=1 // pred_check_branch
      %26 = sbr.rel (0) target = $region29
    $region28: #{_lambda_.2} parent=1 // pred_region
      %s28 = ssub.s32 256, 256
      %29 = vsyncadd [#allocation5], %s28
      %s30 = sshll.u32 [#allocation4], 4
      %s31 = int_to_ptr.vmem [resolvable:$true] %s30
      %36 = dma.hbm_to_vmem [thread:$0]  %s6, 256, %s31, [#allocation5], 128, 128, 8
    $region29: #{_lambda_.2} parent=1 // pred_fallthru
      _
    // Predicated region
    $region30: #{_lambda_.2} parent=1 // pred_check
      _
    $region31: #{_lambda_.2} parent=1 // pred_check_branch
      %38 = sbr.rel (0) target = $region33
    $region32: #{_lambda_.2} parent=1 // pred_region
      %39 = dma.done [#allocation5], 256
    $region33: #{_lambda_.2} parent=1 // pred_fallthru
      _
    %v40 = vld [vmem:[%s0] sm:$0xff]
    %42 = vrot.lane.b32.xlu0 %v40, 113
    %v43 = vpop.permute.xlu0 %42
    %vm45 = vcmask 7168
    %46 = vst.msk [vmem:[#allocation2] sm:$0xff] %vm45, %v43
    %47 = vrot.lane.b32.xlu0 %v40, 1
    %v48 = vpop.permute.xlu0 %47
    %vm50 = vcmask 130056
    %51 = vst.msk [vmem:[#allocation2] sm:$0xff] %vm50, %v48
    %vm52 = vcmask 138368
    %53 = vst.msk [vmem:[#allocation2] sm:$0xff] %vm52, %v43
    %vm54 = vcmask 261256
    %55 = vst.msk [vmem:[#allocation2] sm:$0xff] %vm54, %v48
    %vm56 = vcmask 130048
    %57 = vst.msk [vmem:[#allocation2 + $0x8] sm:$0xff] %vm56, %v40
    %vm58 = vcmask 261248
    %59 = vst.msk [vmem:[#allocation2 + $0x8] sm:$0xff] %vm58, %v40
    %v60 = vld [vmem:[%s1] sm:$0xff]
    %v61 = vld [vmem:[%s1 + $0x8] sm:$0xff]
    %v62 = vld [vmem:[#allocation2] sm:$0xff]
    %v63 = vld [vmem:[#allocation2 + $0x8] sm:$0xff]
    %v64 = vld [vmem:[%s2] sm:$0xff]
    %v65 = vld [vmem:[%s2 + $0x8] sm:$0xff]
    %67 = vset.pattern.permute.xlu0 0
    %68 = vperm.xlu0 %67, %v64
    %v69 = vpop.permute.xlu0 %68
    %72 = vset.pattern.permute.xlu0 0
    %73 = vperm.xlu0 %72, %v65
    %v74 = vpop.permute.xlu0 %73
    %v77 = vsel %vm56, %v60, 0
    %v80 = vsel %vm56, %v61, 0
    %82 = vmatprep.subr.mxu0 0.0
    %83 = vmatpush1.msra.mxu0 %v62
    %84 = vmatprep.subr.mxu0 0.0
    %85 = vmatpush1.msra.mxu0 %v63
    %86 = vmatprep.subr.mxu0 0.0
    %87 = vmatpush1.msra.mxu0 0.0
    %88 = vmatprep.subr.mxu0 0.0
    %89 = vmatpush1.msra.mxu0 0.0
    %90 = vmatprep.subr.mxu0 0.0
    %91 = vmatpush1.msra.mxu0 0.0
    %92 = vmatprep.subr.mxu0 0.0
    %93 = vmatpush1.msra.mxu0 0.0
    %94 = vmatprep.subr.mxu0 0.0
    %95 = vmatpush1.msra.mxu0 0.0
    %96 = vmatprep.subr.mxu0 0.0
    %97 = vmatpush1.msra.mxu0 0.0
    %98 = vmatprep.subr.mxu0 0.0
    %99 = vmatpush1.msra.mxu0 0.0
    %100 = vmatprep.subr.mxu0 0.0
    %101 = vmatpush1.msra.mxu0 0.0
    %102 = vmatprep.subr.mxu0 0.0
    %103 = vmatpush1.msra.mxu0 0.0
    %104 = vmatprep.subr.mxu0 0.0
    %105 = vmatpush1.msra.mxu0 0.0
    %106 = vmatprep.subr.mxu0 0.0
    %107 = vmatpush1.msra.mxu0 0.0
    %108 = vmatprep.subr.mxu0 0.0
    %109 = vmatpush1.msra.mxu0 0.0
    %110 = vmatprep.subr.mxu0 0.0
    %111 = vmatpush1.msra.mxu0 0.0
    %112 = vmatprep.subr.mxu0 0.0
    %113 = vmatpush1.msra.mxu0 0.0
    %114 = vmatprep.subr.mxu0 0.0
    %115 = vmatpush1.msra.mxu0 0.0
    %116 = vmatprep.subr.mxu0 0.0
    %117 = vmatpush1.msra.mxu0 0.0
    %118 = vmatprep.subr.mxu0 0.0
    %119 = vmatpush1.msra.mxu0 0.0
    %120 = vmatprep.subr.mxu0 0.0
    %121 = vmatpush1.msra.mxu0 0.0
    %122 = vmatprep.subr.mxu0 0.0
    %123 = vmatpush1.msra.mxu0 0.0
    %124 = vmatprep.subr.mxu0 0.0
    %125 = vmatpush1.msra.mxu0 0.0
    %126 = vmatprep.subr.mxu0 0.0
    %127 = vmatpush1.msra.mxu0 0.0
    %128 = vmatprep.subr.mxu0 0.0
    %129 = vmatpush1.msra.mxu0 0.0
    %130 = vmatprep.subr.mxu0 0.0
    %131 = vmatpush1.msra.mxu0 0.0
    %132 = vmatprep.subr.mxu0 0.0
    %133 = vmatpush1.msra.mxu0 0.0
    %134 = vmatprep.subr.mxu0 0.0
    %135 = vmatpush1.msra.mxu0 0.0
    %136 = vmatprep.subr.mxu0 0.0
    %137 = vmatpush1.msra.mxu0 0.0
    %138 = vmatprep.subr.mxu0 0.0
    %139 = vmatpush1.msra.mxu0 0.0
    %140 = vmatprep.subr.mxu0 0.0
    %141 = vmatpush1.msra.mxu0 0.0
    %142 = vmatprep.subr.mxu0 0.0
    %143 = vmatpush1.msra.mxu0 0.0
    %144 = vmatprep.subr.mxu0 0.0
    %145 = vmatpush1.msra.mxu0 0.0
    %146 = vmatprep.mubr.f32.mxu0 0.0
    %147 = vmatmul.mubr.f32.gmra.mrb[0].mxu0 %v77
    %v148 = vpop.f32.mrb[0].mxu0
    %v149 = vadd.f32 %v69, %v148
    %v150 = vpop.f32.mrb[0].mxu0
    %151 = vmatprep.mubr.f32.mxu0 0.0
    %152 = vmatmul.mubr.f32.gmra.mrb[0].mxu0 %v80
    %v153 = vpop.f32.mrb[0].mxu0
    %v154 = vadd.f32 %v74, %v153
    %v155 = vpop.f32.mrb[0].mxu0
    %156 = vdwg.mxu0
    %v157 = vmax.f32 %v149, 0.0
    %v158 = vmax.f32 %v154, 0.0
    %159 = vst.msk [vmem:[#allocation3] sm:$0xff] %vm56, %v157
    %160 = vst.msk [vmem:[#allocation3 + $0x8] sm:$0xff] %vm56, %v158
    %161 = vst.msk [vmem:[#allocation3] sm:$0xff] %vm58, %v157
    %162 = vst.msk [vmem:[#allocation3 + $0x8] sm:$0xff] %vm58, %v158
    %165 = vrot.lane.b32.xlu0 %v157, 127
    %v166 = vpop.permute.xlu0 %165
    %167 = vrot.lane.b32.xlu0 %v158, 127
    %v168 = vpop.permute.xlu0 %167
    %vm171 = vcmask 121856
    %172 = vst.msk [vmem:[#allocation3 + $0x10] sm:$0xff] %vm171, %v166
    %173 = vst.msk [vmem:[#allocation3 + $0x18] sm:$0xff] %vm171, %v168
    %174 = vrot.lane.b32.xlu0 %v157, 15
    %v175 = vpop.permute.xlu0 %174
    %176 = vrot.lane.b32.xlu0 %v158, 15
    %v177 = vpop.permute.xlu0 %176
    %vm180 = vcmask 130168
    %181 = vst.msk [vmem:[#allocation3 + $0x10] sm:$0xff] %vm180, %v175
    %182 = vst.msk [vmem:[#allocation3 + $0x18] sm:$0xff] %vm180, %v177
    %vm183 = vcmask 253056
    %184 = vst.msk [vmem:[#allocation3 + $0x10] sm:$0xff] %vm183, %v166
    %185 = vst.msk [vmem:[#allocation3 + $0x18] sm:$0xff] %vm183, %v168
    %vm186 = vcmask 261368
    %187 = vst.msk [vmem:[#allocation3 + $0x10] sm:$0xff] %vm186, %v175
    %188 = vst.msk [vmem:[#allocation3 + $0x18] sm:$0xff] %vm186, %v177
    %v189 = vld [vmem:[%s3] sm:$0xff]
    %v190 = vld [vmem:[%s3 + $0x8] sm:$0xff]
    %v191 = vld [vmem:[#allocation3] sm:$0xff]
    %v192 = vld [vmem:[#allocation3 + $0x8] sm:$0xff]
    %v193 = vld [vmem:[#allocation3 + $0x10] sm:$0xff]
    %v194 = vld [vmem:[#allocation3 + $0x18] sm:$0xff]
    %v195 = vld [vmem:[%s4] sm:$0xff]
    %v196 = vld [vmem:[%s4 + $0x8] sm:$0xff]
    %198 = vset.pattern.permute.xlu0 0
    %199 = vperm.xlu0 %198, %v195
    %v200 = vpop.permute.xlu0 %199
    %203 = vset.pattern.permute.xlu0 0
    %204 = vperm.xlu0 %203, %v196
    %v205 = vpop.permute.xlu0 %204
    %vm207 = vcmask 261120
    %v209 = vsel %vm207, %v189, 0
    %v212 = vsel %vm207, %v190, 0
    %214 = vmatprep.subr.mxu0 0.0
    %215 = vmatpush1.msra.mxu0 %v191
    %216 = vmatprep.subr.mxu0 0.0
    %217 = vmatpush1.msra.mxu0 %v192
    %218 = vmatprep.subr.mxu0 0.0
    %219 = vmatpush1.msra.mxu0 %v193
    %220 = vmatprep.subr.mxu0 0.0
    %221 = vmatpush1.msra.mxu0 %v194
    %222 = vmatprep.subr.mxu0 0.0
    %223 = vmatpush1.msra.mxu0 0.0
    %224 = vmatprep.subr.mxu0 0.0
    %225 = vmatpush1.msra.mxu0 0.0
    %226 = vmatprep.subr.mxu0 0.0
    %227 = vmatpush1.msra.mxu0 0.0
    %228 = vmatprep.subr.mxu0 0.0
    %229 = vmatpush1.msra.mxu0 0.0
    %230 = vmatprep.subr.mxu0 0.0
    %231 = vmatpush1.msra.mxu0 0.0
    %232 = vmatprep.subr.mxu0 0.0
    %233 = vmatpush1.msra.mxu0 0.0
    %234 = vmatprep.subr.mxu0 0.0
    %235 = vmatpush1.msra.mxu0 0.0
    %236 = vmatprep.subr.mxu0 0.0
    %237 = vmatpush1.msra.mxu0 0.0
    %238 = vmatprep.subr.mxu0 0.0
    %239 = vmatpush1.msra.mxu0 0.0
    %240 = vmatprep.subr.mxu0 0.0
    %241 = vmatpush1.msra.mxu0 0.0
    %242 = vmatprep.subr.mxu0 0.0
    %243 = vmatpush1.msra.mxu0 0.0
    %244 = vmatprep.subr.mxu0 0.0
    %245 = vmatpush1.msra.mxu0 0.0
    %246 = vmatprep.subr.mxu0 0.0
    %247 = vmatpush1.msra.mxu0 0.0
    %248 = vmatprep.subr.mxu0 0.0
    %249 = vmatpush1.msra.mxu0 0.0
    %250 = vmatprep.subr.mxu0 0.0
    %251 = vmatpush1.msra.mxu0 0.0
    %252 = vmatprep.subr.mxu0 0.0
    %253 = vmatpush1.msra.mxu0 0.0
    %254 = vmatprep.subr.mxu0 0.0
    %255 = vmatpush1.msra.mxu0 0.0
    %256 = vmatprep.subr.mxu0 0.0
    %257 = vmatpush1.msra.mxu0 0.0
    %258 = vmatprep.subr.mxu0 0.0
    %259 = vmatpush1.msra.mxu0 0.0
    %260 = vmatprep.subr.mxu0 0.0
    %261 = vmatpush1.msra.mxu0 0.0
    %262 = vmatprep.subr.mxu0 0.0
    %263 = vmatpush1.msra.mxu0 0.0
    %264 = vmatprep.subr.mxu0 0.0
    %265 = vmatpush1.msra.mxu0 0.0
    %266 = vmatprep.subr.mxu0 0.0
    %267 = vmatpush1.msra.mxu0 0.0
    %268 = vmatprep.subr.mxu0 0.0
    %269 = vmatpush1.msra.mxu0 0.0
    %270 = vmatprep.subr.mxu0 0.0
    %271 = vmatpush1.msra.mxu0 0.0
    %272 = vmatprep.subr.mxu0 0.0
    %273 = vmatpush1.msra.mxu0 0.0
    %274 = vmatprep.subr.mxu0 0.0
    %275 = vmatpush1.msra.mxu0 0.0
    %276 = vmatprep.subr.mxu0 0.0
    %277 = vmatpush1.msra.mxu0 0.0
    %278 = vmatprep.mubr.f32.mxu0 0.0
    %279 = vmatmul.mubr.f32.gmra.mrb[0].mxu0 %v209
    %v280 = vpop.f32.mrb[0].mxu0
    %v281 = vadd.f32 %v200, %v280
    %v282 = vpop.f32.mrb[0].mxu0
    %283 = vmatprep.mubr.f32.mxu0 0.0
    %284 = vmatmul.mubr.f32.gmra.mrb[0].mxu0 %v212
    %v285 = vpop.f32.mrb[0].mxu0
    %v286 = vadd.f32 %v205, %v285
    %v287 = vpop.f32.mrb[0].mxu0
    %288 = vdwg.mxu0
    %v289 = vmax.f32 %v281, 0.0
    %v290 = vmax.f32 %v286, 0.0
    %v291 = vld [vmem:[%s5] sm:$0xff]
    %v292 = vld [vmem:[%s5 + $0x8] sm:$0xff]
    %v293 = vld [vmem:[#allocation4] sm:$0xff]
    %v294 = vld [vmem:[#allocation4 + $0x8] sm:$0xff]
    %296 = vset.pattern.permute.xlu0 0
    %297 = vperm.xlu0 %296, %v293
    %v298 = vpop.permute.xlu0 %297
    %301 = vset.pattern.permute.xlu0 0
    %302 = vperm.xlu0 %301, %v294
    %v303 = vpop.permute.xlu0 %302
    %vm305 = vcmask 64512
    %v307 = vsel %vm305, %v291, 0
    %v310 = vsel %vm305, %v292, 0
    %312 = vmatprep.subr.mxu0 0.0
    %313 = vmatpush1.msra.mxu0 %v40
    %314 = vmatprep.subr.mxu0 0.0
    %315 = vmatpush1.msra.mxu0 0.0
    %316 = vmatprep.subr.mxu0 0.0
    %317 = vmatpush1.msra.mxu0 0.0
    %318 = vmatprep.subr.mxu0 0.0
    %319 = vmatpush1.msra.mxu0 0.0
    %320 = vmatprep.subr.mxu0 0.0
    %321 = vmatpush1.msra.mxu0 0.0
    %322 = vmatprep.subr.mxu0 0.0
    %323 = vmatpush1.msra.mxu0 0.0
    %324 = vmatprep.subr.mxu0 0.0
    %325 = vmatpush1.msra.mxu0 0.0
    %326 = vmatprep.subr.mxu0 0.0
    %327 = vmatpush1.msra.mxu0 0.0
    %328 = vmatprep.subr.mxu0 0.0
    %329 = vmatpush1.msra.mxu0 0.0
    %330 = vmatprep.subr.mxu0 0.0
    %331 = vmatpush1.msra.mxu0 0.0
    %332 = vmatprep.subr.mxu0 0.0
    %333 = vmatpush1.msra.mxu0 0.0
    %334 = vmatprep.subr.mxu0 0.0
    %335 = vmatpush1.msra.mxu0 0.0
    %336 = vmatprep.subr.mxu0 0.0
    %337 = vmatpush1.msra.mxu0 0.0
    %338 = vmatprep.subr.mxu0 0.0
    %339 = vmatpush1.msra.mxu0 0.0
    %340 = vmatprep.subr.mxu0 0.0
    %341 = vmatpush1.msra.mxu0 0.0
    %342 = vmatprep.subr.mxu0 0.0
    %343 = vmatpush1.msra.mxu0 0.0
    %344 = vmatprep.subr.mxu0 0.0
    %345 = vmatpush1.msra.mxu0 0.0
    %346 = vmatprep.subr.mxu0 0.0
    %347 = vmatpush1.msra.mxu0 0.0
    %348 = vmatprep.subr.mxu0 0.0
    %349 = vmatpush1.msra.mxu0 0.0
    %350 = vmatprep.subr.mxu0 0.0
    %351 = vmatpush1.msra.mxu0 0.0
    %352 = vmatprep.subr.mxu0 0.0
    %353 = vmatpush1.msra.mxu0 0.0
    %354 = vmatprep.subr.mxu0 0.0
    %355 = vmatpush1.msra.mxu0 0.0
    %356 = vmatprep.subr.mxu0 0.0
    %357 = vmatpush1.msra.mxu0 0.0
    %358 = vmatprep.subr.mxu0 0.0
    %359 = vmatpush1.msra.mxu0 0.0
    %360 = vmatprep.subr.mxu0 0.0
    %361 = vmatpush1.msra.mxu0 0.0
    %362 = vmatprep.subr.mxu0 0.0
    %363 = vmatpush1.msra.mxu0 0.0
    %364 = vmatprep.subr.mxu0 0.0
    %365 = vmatpush1.msra.mxu0 0.0
    %366 = vmatprep.subr.mxu0 0.0
    %367 = vmatpush1.msra.mxu0 0.0
    %368 = vmatprep.subr.mxu0 0.0
    %369 = vmatpush1.msra.mxu0 0.0
    %370 = vmatprep.subr.mxu0 0.0
    %371 = vmatpush1.msra.mxu0 0.0
    %372 = vmatprep.subr.mxu0 0.0
    %373 = vmatpush1.msra.mxu0 0.0
    %374 = vmatprep.subr.mxu0 0.0
    %375 = vmatpush1.msra.mxu0 0.0
    %376 = vmatprep.mubr.f32.mxu0 0.0
    %377 = vmatmul.mubr.f32.gmra.mrb[0].mxu0 %v307
    %v378 = vpop.f32.mrb[0].mxu0
    %v379 = vadd.f32 %v298, %v378
    %v380 = vpop.f32.mrb[0].mxu0
    %381 = vmatprep.mubr.f32.mxu0 0.0
    %382 = vmatmul.mubr.f32.gmra.mrb[0].mxu0 %v310
    %v383 = vpop.f32.mrb[0].mxu0
    %v384 = vadd.f32 %v303, %v383
    %v385 = vpop.f32.mrb[0].mxu0
    %386 = vdwg.mxu0
    %v387 = vadd.f32 %v289, %v379
    %v388 = vadd.f32 %v290, %v384
    %v389 = vmax.f32 %v387, 0.0
    %v390 = vmax.f32 %v388, 0.0
    %391 = vst.msk [vmem:[%s7] sm:$0xff] %vm207, %v389
    %392 = vst.msk [vmem:[%s7 + $0x8] sm:$0xff] %vm207, %v390
    // Predicated region
    $region34: #{_lambda_.2} parent=1 // pred_check
      _
    $region35: #{_lambda_.2} parent=1 // pred_check_branch
      %394 = sbr.rel (0) target = $region37
    $region36: #{_lambda_.2} parent=1 // pred_region
      _
    $region37: #{_lambda_.2} parent=1 // pred_fallthru
      _
    // Predicated region
    $region38: #{_lambda_.2} parent=1 // pred_check
      _
    $region39: #{_lambda_.2} parent=1 // pred_check_branch
      %396 = sbr.rel (0) target = $region41
    $region40: #{_lambda_.2} parent=1 // pred_region
      _
    $region41: #{_lambda_.2} parent=1 // pred_fallthru
      _
    %397 = vsyncpa [#allocation5], 1

</llo_original>
